<compile_context>
chip_gen: v7x
topology: tpu7x:2x2x1
jax: 0.10.0
libtpu: 0.0.40
codegen_flags: <defaults>
</compile_context>

<pallas_src>
import functools
import math

import jax
import jax.numpy as jnp
from jax.experimental import pallas as pl
from jax.experimental.pallas import tpu as pltpu


def _sublane_align(dtype):
    """Minimum legal second-minor tile for a dtype (8 f32, 16 bf16, 32 int8)."""
    return 8 * (4 // jnp.dtype(dtype).itemsize)


def _pick_tile(dim, cap, align):
    """Largest tile <= cap that divides `dim` and respects `align`.
    Falls back to the full dimension (always a legal block) -> no padding."""
    if dim <= cap:
        return dim
    t = (cap // align) * align
    while t >= align:
        if dim % t == 0:
            return t
        t -= align
    # No aligned divisor <= cap; whole-dim block is always legal (may be large
    # for awkward prime-ish dims -- acceptable for the shapes used here).
    return dim


# --------------------------- Linear: y = x @ W^T + b ---------------------------

def _linear_kernel(x_ref, w_ref, b_ref, o_ref, acc_ref):
    k = pl.program_id(2)

    @pl.when(k == 0)
    def _init():
        acc_ref[...] = jnp.zeros_like(acc_ref)

    # x: (tm, tk), w: (tn, tk) kept in PyTorch layout -> contract on dim 1 of
    # both (x @ w.T). Native dtypes into the MXU, f32 accumulation.
    acc_ref[...] += jax.lax.dot_general(
        x_ref[...], w_ref[...], (((1,), (1,)), ((), ())),
        preferred_element_type=jnp.float32)

    @pl.when(k == pl.num_programs(2) - 1)
    def _finalize():
        o_ref[...] = (acc_ref[...] + b_ref[...].astype(jnp.float32)).astype(o_ref.dtype)


def linear(x2d, w, b=None, *, tm_cap=512, tn_cap=512, tk_cap=1024):
    """x2d: (M, K); w: (N, K) (PyTorch layout, used as-is); b: (N,) -> (M, N)."""
    M, K = x2d.shape
    N = w.shape[0]
    if b is None:
        b = jnp.zeros((N,), x2d.dtype)
    b2d = b.reshape(1, N)

    tm = _pick_tile(M, tm_cap, _sublane_align(x2d.dtype))
    tn = _pick_tile(N, tn_cap, 128)
    tk = _pick_tile(K, tk_cap, 128)

    return pl.pallas_call(
        _linear_kernel,
        out_shape=jax.ShapeDtypeStruct((M, N), x2d.dtype),
        grid_spec=pltpu.PrefetchScalarGridSpec(
            num_scalar_prefetch=0,
            grid=(M // tm, N // tn, K // tk),
            in_specs=[
                pl.BlockSpec((tm, tk), lambda i, j, k: (i, k)),
                pl.BlockSpec((tn, tk), lambda i, j, k: (j, k)),   # no transpose
                pl.BlockSpec((1, tn), lambda i, j, k: (0, j)),
            ],
            out_specs=pl.BlockSpec((tm, tn), lambda i, j, k: (i, j)),
            scratch_shapes=[pltpu.VMEM((tm, tn), jnp.float32)],
        ),
        compiler_params=pltpu.CompilerParams(
            dimension_semantics=("parallel", "parallel", "arbitrary"),
            vmem_limit_bytes=64 * 1024 * 1024),
    )(x2d, w, b2d)


# ----------------------- Flash-style causal attention --------------------------

def _flash_kernel(q_ref, k_ref, v_ref, o_ref, m_sc, l_sc, acc_sc, *,
                  scale, block_q, block_k):
    qi = pl.program_id(1)
    ki = pl.program_id(2)

    @pl.when(ki == 0)
    def _init():
        m_sc[...] = jnp.full_like(m_sc, -jnp.inf)
        l_sc[...] = jnp.zeros_like(l_sc)
        acc_sc[...] = jnp.zeros_like(acc_sc)

    q_start = qi * block_q
    q_end = q_start + block_q - 1
    k_start = ki * block_k
    k_end = k_start + block_k - 1

    def update(masked):
        # Native-dtype q/k straight into the MXU; f32 scores.
        s = jax.lax.dot_general(q_ref[...], k_ref[...],
                                (((1,), (1,)), ((), ())),
                                preferred_element_type=jnp.float32) * scale
        if masked:   # only diagonal-straddling blocks pay for iota/where
            rows = q_start + jax.lax.broadcasted_iota(
                jnp.int32, (block_q, block_k), 0)
            cols = k_start + jax.lax.broadcasted_iota(
                jnp.int32, (block_q, block_k), 1)
            s = jnp.where(rows >= cols, s, -1e30)

        m_prev = m_sc[...]
        m_new = jnp.maximum(m_prev, jnp.max(s, axis=-1, keepdims=True))
        alpha = jnp.exp(m_prev - m_new)
        p = jnp.exp(s - m_new)
        l_sc[...] = alpha * l_sc[...] + jnp.sum(p, axis=-1, keepdims=True)
        acc_sc[...] = alpha * acc_sc[...] + jnp.dot(
            p.astype(v_ref.dtype), v_ref[...], preferred_element_type=jnp.float32)
        m_sc[...] = m_new

    fully_visible = k_end <= q_start                       # below the diagonal
    straddles = jnp.logical_and(k_start <= q_end, k_end > q_start)
    # Blocks entirely above the diagonal run neither branch (and, thanks to the
    # clamped index_map, also never get a fresh K/V DMA).

    @pl.when(fully_visible)
    def _unmasked():
        update(masked=False)

    @pl.when(straddles)
    def _masked():
        update(masked=True)

    @pl.when(ki == pl.num_programs(2) - 1)
    def _finalize():
        inv_l = pl.reciprocal(l_sc[...], approx=True)   # EUP slot, ~free
        o_ref[...] = (acc_sc[...] * inv_l).astype(o_ref.dtype)


def flash_causal_attention(q, k, v, *, block_q_cap=256, block_k_cap=256):
    """q, k, v: (B*H, T, D) -> (B*H, T, D) causal softmax(q k^T / sqrt(D)) v."""
    BH, T, D = q.shape
    scale = 1.0 / math.sqrt(D)
    bq = _pick_tile(T, block_q_cap, _sublane_align(q.dtype))
    bk = _pick_tile(T, block_k_cap, 128)     # lane dim of the score tile

    def kv_index_map(b, i, j):
        # Clamp past-diagonal kv steps to the last needed block so Pallas
        # elides the duplicate DMA; the pl.when guards avoid re-accumulation.
        last_needed = ((i + 1) * bq - 1) // bk
        return (b, jnp.minimum(j, last_needed), 0)

    kernel = functools.partial(_flash_kernel, scale=scale,
                               block_q=bq, block_k=bk)
    return pl.pallas_call(
        kernel,
        out_shape=jax.ShapeDtypeStruct((BH, T, D), q.dtype),
        grid_spec=pltpu.PrefetchScalarGridSpec(
            num_scalar_prefetch=0,
            grid=(BH, T // bq, T // bk),
            in_specs=[
                pl.BlockSpec((None, bq, D), lambda b, i, j: (b, i, 0)),
                pl.BlockSpec((None, bk, D), kv_index_map),
                pl.BlockSpec((None, bk, D), kv_index_map),
            ],
            out_specs=pl.BlockSpec((None, bq, D), lambda b, i, j: (b, i, 0)),
            scratch_shapes=[
                pltpu.VMEM((bq, 1), jnp.float32),   # running max
                pltpu.VMEM((bq, 1), jnp.float32),   # running denom
                pltpu.VMEM((bq, D), jnp.float32),   # running numerator
            ],
        ),
        compiler_params=pltpu.CompilerParams(
            dimension_semantics=("parallel", "parallel", "arbitrary"),
            vmem_limit_bytes=64 * 1024 * 1024),
    )(q, k, v)


# ------------------------------ Full forward pass ------------------------------

def causal_self_attention(x, params, n_head):
    """Forward of CausalSelfAttention (default config, eval mode). x: (B, T, C)."""
    B, T, C = x.shape
    assert C % n_head == 0
    D = C // n_head

    # qkv projection (bias fused in-kernel, weight consumed in (3C, C) layout)
    qkv = linear(x.reshape(B * T, C), params["c_attn_w"], params["c_attn_b"])
    # (B*T, 3C) -> (3, B*H, T, D) head-major layout for the flash kernel.
    # TODO(synk): this transpose (and the inverse one below) could be folded
    # into the attention BlockSpecs when D / C are 128-multiples; kept as XLA
    # layout plumbing here so the kernel block shapes stay legal at small D.
    qkv = qkv.reshape(B, T, 3, n_head, D)
    qkv = jnp.transpose(qkv, (2, 0, 3, 1, 4)).reshape(3, B * n_head, T, D)
    q, k, v = qkv[0], qkv[1], qkv[2]

    y = flash_causal_attention(q, k, v)                      # (B*H, T, D)

    y = y.reshape(B, n_head, T, D).transpose(0, 2, 1, 3).reshape(B * T, C)
    out = linear(y, params["c_proj_w"], params["c_proj_b"])  # output projection
    # TODO(synk): rope(pos), adaptive_span, residual_attention, in_gate,
    # sparse_topk and train-mode dropout branches are not implemented; this
    # covers the default flash-causal eval-mode path of the module.
    return out.reshape(B, T, C)


# ------------------------------- Pure-JAX reference ----------------------------

def causal_self_attention_ref(x, params, n_head):
    B, T, C = x.shape
    D = C // n_head
    qkv = x @ params["c_attn_w"].T + params["c_attn_b"]
    q, k, v = jnp.split(qkv, 3, axis=-1)

    def heads(t):
        return t.reshape(B, T, n_head, D).transpose(0, 2, 1, 3)

    q, k, v = heads(q), heads(k), heads(v)
    att = (q @ jnp.swapaxes(k, -1, -2)) * (1.0 / math.sqrt(D))
    mask = jnp.tril(jnp.ones((T, T), dtype=bool))
    att = jnp.where(mask[None, None], att, -jnp.inf)
    att = jax.nn.softmax(att, axis=-1)
    y = att @ v
    y = y.transpose(0, 2, 1, 3).reshape(B, T, C)
    return y @ params["c_proj_w"].T + params["c_proj_b"]


if __name__ == "__main__":
    key = jax.random.PRNGKey(0)
    B, T, C, H = 2, 8, 32, 4                  # small: batch=2, seq=8, hidden=32
    ks = jax.random.split(key, 5)
    x = jax.random.normal(ks[0], (B, T, C), dtype=jnp.float32)
    params = {
        "c_attn_w": 0.1 * jax.random.normal(ks[1], (3 * C, C), dtype=jnp.float32),
        "c_attn_b": 0.1 * jax.random.normal(ks[2], (3 * C,), dtype=jnp.float32),
        "c_proj_w": 0.1 * jax.random.normal(ks[3], (C, C), dtype=jnp.float32),
        "c_proj_b": 0.1 * jax.random.normal(ks[4], (C,), dtype=jnp.float32),
    }

    out = causal_self_attention(x, params, n_head=H)
    out = jax.block_until_ready(out)

    ref = causal_self_attention_ref(x, params, n_head=H)
    assert out.shape == (B, T, C)
    err = jnp.max(jnp.abs(out - ref))
    assert jnp.allclose(out, ref, atol=2e-3, rtol=2e-3), f"max abs err {err}"
    print("KERNEL_OK")
</pallas_src>

<mosaic_0001>
module attributes {stable_mosaic.version = 11 : i64} {
  func.func @_linear_kernel(%arg0: i32, %arg1: i32, %arg2: i32, %arg3: memref<16x32xf32, #tpu.memory_space<vmem>>, %arg4: memref<96x32xf32, #tpu.memory_space<vmem>>, %arg5: memref<1x96xf32, #tpu.memory_space<vmem>>, %arg6: memref<16x96xf32, #tpu.memory_space<vmem>>, %arg7: memref<16x96xf32, #tpu.memory_space<vmem>>) attributes {dimension_semantics = [#tpu.dimension_semantics<parallel>, #tpu.dimension_semantics<parallel>, #tpu.dimension_semantics<arbitrary>], iteration_bounds = array<i64: 1, 1, 1>, scalar_prefetch = 0 : i64, scratch_operands = 1 : i64, tpu.core_type = #tpu.core_type<tc>, window_params = [{transform_indices = @transform_0, window_bounds = array<i64: 16, 32>}, {transform_indices = @transform_1, window_bounds = array<i64: 96, 32>}, {transform_indices = @transform_2, window_bounds = array<i64: 1, 96>}, {transform_indices = @transform_3, window_bounds = array<i64: 16, 96>}]} {
    %c0_i32 = arith.constant 0 : i32
    %0 = arith.cmpi eq, %arg2, %c0_i32 : i32
    %1 = arith.extui %0 : i1 to i32
    %c0_i32_0 = arith.constant 0 : i32
    %2 = arith.cmpi ne, %1, %c0_i32_0 : i32
    scf.if %2 {
      %cst_10 = arith.constant 0.000000e+00 : f32
      %12 = vector.broadcast %cst_10 : f32 to vector<16x96xf32>
      %c0_11 = arith.constant 0 : index
      %c0_12 = arith.constant 0 : index
      %13 = vector.load %arg7[%c0_11, %c0_12] : memref<16x96xf32, #tpu.memory_space<vmem>>, vector<16x96xf32>
      tpu.vector_store %arg7[%c0_11, %c0_12], %12 {strides = array<i32>} : memref<16x96xf32, #tpu.memory_space<vmem>>, vector<16x96xf32>,
    } else {
    }
    %c0 = arith.constant 0 : index
    %c0_1 = arith.constant 0 : index
    %3 = vector.load %arg7[%c0, %c0_1] : memref<16x96xf32, #tpu.memory_space<vmem>>, vector<16x96xf32>
    %c0_2 = arith.constant 0 : index
    %c0_3 = arith.constant 0 : index
    %4 = vector.load %arg3[%c0_2, %c0_3] : memref<16x32xf32, #tpu.memory_space<vmem>>, vector<16x32xf32>
    %c0_4 = arith.constant 0 : index
    %c0_5 = arith.constant 0 : index
    %5 = vector.load %arg4[%c0_4, %c0_5] : memref<96x32xf32, #tpu.memory_space<vmem>>, vector<96x32xf32>
    %cst = arith.constant dense<0.000000e+00> : vector<16x96xf32>
    %6 = tpu.matmul %4, %5, %cst {dimension_numbers = #tpu.dot_dimension_numbers<[1], [1], [0], [0], [0, 0, 1, 0], [], []>} : vector<16x32xf32>, vector<96x32xf32>, vector<16x96xf32> -> vector<16x96xf32>
    %7 = arith.addf %3, %6 : vector<16x96xf32>
    %c0_6 = arith.constant 0 : index
    %c0_7 = arith.constant 0 : index
    %8 = vector.load %arg7[%c0_6, %c0_7] : memref<16x96xf32, #tpu.memory_space<vmem>>, vector<16x96xf32>
    tpu.vector_store %arg7[%c0_6, %c0_7], %7 {strides = array<i32>} : memref<16x96xf32, #tpu.memory_space<vmem>>, vector<16x96xf32>,
    %c0_i32_8 = arith.constant 0 : i32
    %9 = arith.cmpi eq, %arg2, %c0_i32_8 : i32
    %10 = arith.extui %9 : i1 to i32
    %c0_i32_9 = arith.constant 0 : i32
    %11 = arith.cmpi ne, %10, %c0_i32_9 : i32
    scf.if %11 {
      %c0_10 = arith.constant 0 : index
      %c0_11 = arith.constant 0 : index
      %12 = vector.load %arg7[%c0_10, %c0_11] : memref<16x96xf32, #tpu.memory_space<vmem>>, vector<16x96xf32>
      %c0_12 = arith.constant 0 : index
      %c0_13 = arith.constant 0 : index
      %13 = vector.load %arg5[%c0_12, %c0_13] : memref<1x96xf32, #tpu.memory_space<vmem>>, vector<1x96xf32>
      %14 = vector.broadcast %13 : vector<1x96xf32> to vector<16x96xf32>
      %15 = arith.addf %12, %14 : vector<16x96xf32>
      %c0_14 = arith.constant 0 : index
      %c0_15 = arith.constant 0 : index
      %16 = vector.load %arg6[%c0_14, %c0_15] : memref<16x96xf32, #tpu.memory_space<vmem>>, vector<16x96xf32>
      tpu.vector_store %arg6[%c0_14, %c0_15], %15 {strides = array<i32>} : memref<16x96xf32, #tpu.memory_space<vmem>>, vector<16x96xf32>,
    } else {
    }
    return
  }
  func.func @transform_0(%arg0: i32, %arg1: i32, %arg2: i32) -> (i32, i32) {
    %c0_i32 = arith.constant 0 : i32
    return %arg0, %arg2 : i32, i32
  }
  func.func @transform_1(%arg0: i32, %arg1: i32, %arg2: i32) -> (i32, i32) {
    %c0_i32 = arith.constant 0 : i32
    return %arg1, %arg2 : i32, i32
  }
  func.func @transform_2(%arg0: i32, %arg1: i32, %arg2: i32) -> (i32, i32) {
    %c0_i32 = arith.constant 0 : i32
    %c0_i32_0 = arith.constant 0 : i32
    return %c0_i32, %arg1 : i32, i32
  }
  func.func @transform_3(%arg0: i32, %arg1: i32, %arg2: i32) -> (i32, i32) {
    %c0_i32 = arith.constant 0 : i32
    return %arg0, %arg1 : i32, i32
  }
}

</mosaic_0001>

<llo_original>
// kernel: tpu_custom_call.1
$region0: #{tpu_custom_call.1}
  #allocation0 [shape = 'u32[]', space=smem, size = 0x4, offset = 0x4, fixed_abs, tag = 'smem constant byte address 0x4 - core index']
  #allocation1 [shape = 'u32[144,128]{1,0:T(1,128)}', space=vmem, size = 0x12000, scoped, tag = 'internal scratch']
  #allocation2 [shape = 'f32[16,96]{1,0:T(8,128)}', space=vmem, size = 0x2000, scoped, tag = 'scratch operand']
  %s0 = inlined_call_operand.hbm [shape: f32[16,32], index: 0, kind: input, shape index: {}]
  %s1 = inlined_call_operand.hbm [shape: f32[96,32], index: 1, kind: input, shape index: {}]
  %s2 = inlined_call_operand.hbm [shape: f32[1,96], index: 2, kind: input, shape index: {}]
  %s3 = inlined_call_operand.hbm [shape: f32[16,96], index: 3, kind: output, shape index: {}]
  %s4 = sld [smem:[#allocation0]]
  $region42: #{tpu_custom_call.1} parent=0
    _
  %s6 = ssub.s32 1, %s4
  %s7 = scalar_select 0, %s6, %s4
  $region1: #{tpu_custom_call.1} parent=0
    #allocation3 [shape = 'u8[8192]{0}', space=vmem, size = 0x2000, scoped, tag = 'input window, operand 0, single buffered']
    #allocation4 [shape = 's32[1]{0}', space=sflag, size = 0x4, scoped, tag = 'scoped memory for tpu_custom_call.1']
    #allocation5 [shape = 's32[1]{0}', space=sflag, size = 0x4, scoped, tag = 'scoped memory for tpu_custom_call.1']
    #allocation6 [shape = 'u8[49152]{0}', space=vmem, size = 0xc000, scoped, tag = 'input window, operand 1, single buffered']
    #allocation7 [shape = 's32[1]{0}', space=sflag, size = 0x4, scoped, tag = 'scoped memory for tpu_custom_call.1']
    #allocation8 [shape = 'u8[512]{0}', space=vmem, size = 0x400, scoped, tag = 'input window, operand 2, single buffered']
    #allocation9 [shape = 'u8[8192]{0}', space=vmem, size = 0x2000, scoped, tag = 'output window, operand 0, single buffered']
    %8 = vsyncpa [#allocation4], 0
    %9 = vsyncpa [#allocation7], 0
    %10 = vsyncpa [#allocation5], 0
    // Predicated region
    $region2: #{tpu_custom_call.1} parent=1 // pred_check
      _
    $region3: #{tpu_custom_call.1} parent=1 // pred_check_branch
      %12 = sbr.rel (0) target = $region5
    $region4: #{tpu_custom_call.1} parent=1 // pred_region
      %s14 = ssub.s32 256, 256
      %15 = vsyncadd [#allocation4], %s14
      %s16 = sshll.u32 [#allocation3], 4
      %s17 = int_to_ptr.vmem [resolvable:$true] %s16
      %22 = dma.hbm_to_vmem [thread:$0]  %s0, 256, %s17, [#allocation4], 128, 128, 8
    $region5: #{tpu_custom_call.1} parent=1 // pred_fallthru
      _
    // Predicated region
    $region6: #{tpu_custom_call.1} parent=1 // pred_check
      _
    $region7: #{tpu_custom_call.1} parent=1 // pred_check_branch
      %24 = sbr.rel (0) target = $region9
    $region8: #{tpu_custom_call.1} parent=1 // pred_region
      %s26 = ssub.s32 1536, 1536
      %27 = vsyncadd [#allocation7], %s26
      %s28 = sshll.u32 [#allocation6], 4
      %s29 = int_to_ptr.vmem [resolvable:$true] %s28
      %34 = dma.hbm_to_vmem [thread:$0]  %s1, 1536, %s29, [#allocation7], 128, 128, 8
    $region9: #{tpu_custom_call.1} parent=1 // pred_fallthru
      _
    // Predicated region
    $region10: #{tpu_custom_call.1} parent=1 // pred_check
      _
    $region11: #{tpu_custom_call.1} parent=1 // pred_check_branch
      %36 = sbr.rel (0) target = $region13
    $region12: #{tpu_custom_call.1} parent=1 // pred_region
      %s38 = ssub.s32 16, 16
      %39 = vsyncadd [#allocation7], %s38
      %s41 = sshll.u32 [#allocation8], 4
      %s42 = int_to_ptr.vmem [resolvable:$true] %s41
      %44 = dma.hbm_to_vmem [thread:$0]  %s2, 16, %s42, [#allocation7]
    $region13: #{tpu_custom_call.1} parent=1 // pred_fallthru
      _
    // Predicated region
    $region14: #{tpu_custom_call.1} parent=1 // pred_check
      _
    $region15: #{tpu_custom_call.1} parent=1 // pred_check_branch
      %46 = sbr.rel (0) target = $region17
    $region16: #{tpu_custom_call.1} parent=1 // pred_region
      %47 = dma.done [#allocation4], 256
    $region17: #{tpu_custom_call.1} parent=1 // pred_fallthru
      _
    // Predicated region
    $region18: #{tpu_custom_call.1} parent=1 // pred_check
      _
    $region19: #{tpu_custom_call.1} parent=1 // pred_check_branch
      %49 = sbr.rel (0) target = $region21
    $region20: #{tpu_custom_call.1} parent=1 // pred_region
      %50 = dma.done [#allocation7], 1536
    $region21: #{tpu_custom_call.1} parent=1 // pred_fallthru
      _
    // Predicated region
    $region22: #{tpu_custom_call.1} parent=1 // pred_check
      _
    $region23: #{tpu_custom_call.1} parent=1 // pred_check_branch
      %52 = sbr.rel (0) target = $region25
    $region24: #{tpu_custom_call.1} parent=1 // pred_region
      %53 = dma.done [#allocation7], 16
    $region25: #{tpu_custom_call.1} parent=1 // pred_fallthru
      _
    %p54 = scmp.eq.s32.totalorder 0, 0
    // Predicated region
    $region26: #{tpu_custom_call.1} parent=1 // pred_check
      %p55 = pneg %p54
    $region27: #{tpu_custom_call.1} parent=1 // pred_check_branch
      %57 = sbr.rel (%p55) target = $region29
    $region28: #{tpu_custom_call.1} parent=1 // pred_region
      %vm58 = vcmask 785408
      %59 = vst.msk [vmem:[#allocation2] sm:$0xff] %vm58, 0.0
      %60 = vst.msk [vmem:[#allocation2 + $0x8] sm:$0xff] %vm58, 0.0
    $region29: #{tpu_custom_call.1} parent=1 // pred_fallthru
      _
    %v61 = vld [vmem:[#allocation2] sm:$0xff]
    %v62 = vld [vmem:[#allocation2 + $0x8] sm:$0xff]
    %v63 = vld [vmem:[#allocation3] sm:$0xff]
    %v64 = vld [vmem:[#allocation3 + $0x8] sm:$0xff]
    %v65 = vld [vmem:[#allocation6] sm:$0xff]
    %v66 = vld [vmem:[#allocation6 + $0x8] sm:$0xff]
    %v67 = vld [vmem:[#allocation6 + $0x10] sm:$0xff]
    %v68 = vld [vmem:[#allocation6 + $0x18] sm:$0xff]
    %v69 = vld [vmem:[#allocation6 + $0x20] sm:$0xff]
    %v70 = vld [vmem:[#allocation6 + $0x28] sm:$0xff]
    %v71 = vld [vmem:[#allocation6 + $0x30] sm:$0xff]
    %v72 = vld [vmem:[#allocation6 + $0x38] sm:$0xff]
    %v73 = vld [vmem:[#allocation6 + $0x40] sm:$0xff]
    %v74 = vld [vmem:[#allocation6 + $0x48] sm:$0xff]
    %v75 = vld [vmem:[#allocation6 + $0x50] sm:$0xff]
    %v76 = vld [vmem:[#allocation6 + $0x58] sm:$0xff]
    %vm77 = vcmask 261120
    %v79 = vsel %vm77, %v63, 0
    %v82 = vsel %vm77, %v64, 0
    %v85 = vsel %vm77, %v65, 0
    %v88 = vsel %vm77, %v66, 0
    %v91 = vsel %vm77, %v67, 0
    %v94 = vsel %vm77, %v68, 0
    %v97 = vsel %vm77, %v69, 0
    %v100 = vsel %vm77, %v70, 0
    %v103 = vsel %vm77, %v71, 0
    %v106 = vsel %vm77, %v72, 0
    %v109 = vsel %vm77, %v73, 0
    %v112 = vsel %vm77, %v74, 0
    %v115 = vsel %vm77, %v75, 0
    %v118 = vsel %vm77, %v76, 0
    %120 = vmatprep.subr.mxu0 0.0
    %121 = vmatpush1.xpose.msra.mxu0 %v85
    %122 = vmatprep.subr.mxu0 0.0
    %123 = vmatpush1.xpose.msra.mxu0 %v88
    %124 = vmatprep.subr.mxu0 0.0
    %125 = vmatpush1.xpose.msra.mxu0 %v91
    %126 = vmatprep.subr.mxu0 0.0
    %127 = vmatpush1.xpose.msra.mxu0 %v94
    %128 = vmatprep.subr.mxu0 0.0
    %129 = vmatpush1.xpose.msra.mxu0 %v97
    %130 = vmatprep.subr.mxu0 0.0
    %131 = vmatpush1.xpose.msra.mxu0 %v100
    %132 = vmatprep.subr.mxu0 0.0
    %133 = vmatpush1.xpose.msra.mxu0 %v103
    %134 = vmatprep.subr.mxu0 0.0
    %135 = vmatpush1.xpose.msra.mxu0 %v106
    %136 = vmatprep.subr.mxu0 0.0
    %137 = vmatpush1.xpose.msra.mxu0 %v109
    %138 = vmatprep.subr.mxu0 0.0
    %139 = vmatpush1.xpose.msra.mxu0 %v112
    %140 = vmatprep.subr.mxu0 0.0
    %141 = vmatpush1.xpose.msra.mxu0 %v115
    %142 = vmatprep.subr.mxu0 0.0
    %143 = vmatpush1.xpose.msra.mxu0 %v118
    %144 = vmatprep.subr.mxu0 0.0
    %145 = vmatpush1.xpose.msra.mxu0 0.0
    %146 = vmatprep.subr.mxu0 0.0
    %147 = vmatpush1.xpose.msra.mxu0 0.0
    %148 = vmatprep.subr.mxu0 0.0
    %149 = vmatpush1.xpose.msra.mxu0 0.0
    %150 = vmatprep.subr.mxu0 0.0
    %151 = vmatpush1.xpose.msra.mxu0 0.0
    %152 = vmatprep.subr.mxu0 0.0
    %153 = vmatpush1.xpose.msra.mxu0 0.0
    %154 = vmatprep.subr.mxu0 0.0
    %155 = vmatpush1.xpose.msra.mxu0 0.0
    %156 = vmatprep.subr.mxu0 0.0
    %157 = vmatpush1.xpose.msra.mxu0 0.0
    %158 = vmatprep.subr.mxu0 0.0
    %159 = vmatpush1.xpose.msra.mxu0 0.0
    %160 = vmatprep.subr.mxu0 0.0
    %161 = vmatpush1.xpose.msra.mxu0 0.0
    %162 = vmatprep.subr.mxu0 0.0
    %163 = vmatpush1.xpose.msra.mxu0 0.0
    %164 = vmatprep.subr.mxu0 0.0
    %165 = vmatpush1.xpose.msra.mxu0 0.0
    %166 = vmatprep.subr.mxu0 0.0
    %167 = vmatpush1.xpose.msra.mxu0 0.0
    %168 = vmatprep.subr.mxu0 0.0
    %169 = vmatpush1.xpose.msra.mxu0 0.0
    %170 = vmatprep.subr.mxu0 0.0
    %171 = vmatpush1.xpose.msra.mxu0 0.0
    %172 = vmatprep.subr.mxu0 0.0
    %173 = vmatpush1.xpose.msra.mxu0 0.0
    %174 = vmatprep.subr.mxu0 0.0
    %175 = vmatpush1.xpose.msra.mxu0 0.0
    %176 = vmatprep.subr.mxu0 0.0
    %177 = vmatpush1.xpose.msra.mxu0 0.0
    %178 = vmatprep.subr.mxu0 0.0
    %179 = vmatpush1.xpose.msra.mxu0 0.0
    %180 = vmatprep.subr.mxu0 0.0
    %181 = vmatpush1.xpose.msra.mxu0 0.0
    %182 = vmatprep.subr.mxu0 0.0
    %183 = vmatpush1.xpose.msra.mxu0 0.0
    %184 = vmatprep.mubr.f32.mxu0 0.0
    %185 = vmatmul.mubr.f32.gmra.mrb[0].mxu0 %v79
    %v186 = vpop.f32.mrb[0].mxu0
    %v187 = vadd.f32 0.0, %v186
    %v188 = vpop.f32.mrb[0].mxu0
    %189 = vmatprep.mubr.f32.mxu0 0.0
    %190 = vmatmul.mubr.f32.gmra.mrb[0].mxu0 %v82
    %v191 = vpop.f32.mrb[0].mxu0
    %v192 = vadd.f32 0.0, %v191
    %v193 = vpop.f32.mrb[0].mxu0
    %194 = vdwg.mxu0
    %v195 = vadd.f32 %v61, %v187
    %v196 = vadd.f32 %v62, %v192
    %vm197 = vcmask 785408
    %198 = vst.msk [vmem:[#allocation2] sm:$0xff] %vm197, %v195
    %199 = vst.msk [vmem:[#allocation2 + $0x8] sm:$0xff] %vm197, %v196
    // Predicated region
    $region30: #{tpu_custom_call.1} parent=1 // pred_check
      %p200 = pneg %p54
    $region31: #{tpu_custom_call.1} parent=1 // pred_check_branch
      %202 = sbr.rel (%p200) target = $region33
    $region32: #{tpu_custom_call.1} parent=1 // pred_region
      %v203 = vld [vmem:[#allocation2] sm:$0xff]
      %v204 = vld [vmem:[#allocation2 + $0x8] sm:$0xff]
      %v205 = vld [vmem:[#allocation8] sm:$0x1]
      %v207 = vlaneseq
      %v208 = vshrl.u32 %v207, 7
      %v209 = vsub.s32 0, %v208
      %v210 = vrot.slane %v205, %v209
      %v212 = vadd.f32 %v203, %v210
      %v213 = vadd.f32 %v204, %v210
      %214 = vst.msk [vmem:[#allocation9] sm:$0xff] %vm197, %v212
      %215 = vst.msk [vmem:[#allocation9 + $0x8] sm:$0xff] %vm197, %v213
    $region33: #{tpu_custom_call.1} parent=1 // pred_fallthru
      _
    // Predicated region
    $region34: #{tpu_custom_call.1} parent=1 // pred_check
      _
    $region35: #{tpu_custom_call.1} parent=1 // pred_check_branch
      %217 = sbr.rel (0) target = $region37
    $region36: #{tpu_custom_call.1} parent=1 // pred_region
      %s219 = ssub.s32 256, 256
      %220 = vsyncadd [#allocation5], %s219
      %s221 = sshll.u32 [#allocation9], 4
      %s222 = int_to_ptr.vmem [resolvable:$true] %s221
      %227 = dma.vmem_to_hbm [thread:$0]  %s222, 256, %s3, [#allocation5], 128, 128, 8
    $region37: #{tpu_custom_call.1} parent=1 // pred_fallthru
      _
    // Predicated region
    $region38: #{tpu_custom_call.1} parent=1 // pred_check
      _
    $region39: #{tpu_custom_call.1} parent=1 // pred_check_branch
      %229 = sbr.rel (0) target = $region41
    $region40: #{tpu_custom_call.1} parent=1 // pred_region
      %230 = dma.done [#allocation5], 256
    $region41: #{tpu_custom_call.1} parent=1 // pred_fallthru
      _
    %231 = vsyncpa [#allocation4], 1
    %232 = vsyncpa [#allocation7], 1
    %233 = vsyncpa [#allocation5], 1

</llo_original>
